<compile_context>
chip_gen: v6e
topology: v6e:2x2x1
jax: 0.10.0
libtpu: 0.0.40
codegen_flags: <defaults>
</compile_context>

<pallas_src>
import jax
import jax.numpy as jnp
from jax.experimental import pallas as pl
from jax.experimental.pallas import tpu as pltpu


# ----------------------------------------------------------------------------
# Pure-Python mirror of the modula module algebra (reference implementation).
# Only forward() is mirrored; initialize/normalize/regularize are zero-length
# weight bookkeeping with no tensor compute.
# ----------------------------------------------------------------------------
class Module:
    def __init__(self):
        self.mass = None
        self.sensitivity = None
        self.length = None
        self.children = []

    def forward(self, x, w):
        raise NotImplementedError

    def __call__(self, x, w):
        return self.forward(x, w)


class Add(Module):
    def __init__(self):
        super().__init__()
        self.mass = 0
        self.sensitivity = 1
        self.length = 0
        self.forward = lambda x, w: sum(x)


class ScalarMultiply(Module):
    def __init__(self, alpha):
        super().__init__()
        self.mass = 0
        self.sensitivity = abs(alpha)
        self.length = 0
        self.alpha = alpha

    def forward(self, x, _):
        if isinstance(x, list):
            return [self.forward(xi, _) for xi in x]
        return self.alpha * x


class TupleModule(Module):
    def __init__(self, tuple_of_modules):
        super().__init__()
        self.children = tuple_of_modules
        self.length = sum(c.length for c in self.children)
        self.mass = sum(c.mass for c in self.children)
        self.sensitivity = sum(c.sensitivity for c in self.children)

    def forward(self, x, w):
        output = []
        for child in self.children:
            w_child = w[: child.length]
            output.append(child.forward(x, w_child))
            w = w[child.length:]
        return output


class CompositeModule(Module):
    def __init__(self, m1, m0):
        super().__init__()
        self.children = (m0, m1)
        self.length = m0.length + m1.length
        self.mass = m0.mass + m1.mass
        self.sensitivity = m1.sensitivity * m0.sensitivity

    def forward(self, x, w):
        m0, m1 = self.children
        w0 = w[: m0.length]
        w1 = w[m0.length:]
        return m1.forward(m0.forward(x, w0), w1)


ALPHA_A = 2.0
ALPHA_B = 3.0
ALPHA_S = 0.5

_branches = TupleModule((ScalarMultiply(ALPHA_A), ScalarMultiply(ALPHA_B)))
_summed = CompositeModule(Add(), _branches)
composite_ref = CompositeModule(_summed, ScalarMultiply(ALPHA_S))
# length == 0 -> empty weight vector; nothing to initialize/normalize.

# Trace-time constant fold:  A*(S*x) + B*(S*x) == ((A + B) * S) * x
FUSED_SCALE = (ALPHA_A + ALPHA_B) * ALPHA_S   # = 2.5


# ----------------------------------------------------------------------------
# Pallas kernel: single fused multiply (1 VALU op per vreg).
# ----------------------------------------------------------------------------
def scale_kernel(x_ref, o_ref):
    o_ref[...] = x_ref[...] * FUSED_SCALE


LANES = 128
SUBLANES = 8
_SMALL_ROWS = 2048     # <= 1 MiB f32 slab -> gridless single VMEM block
_BLOCK_ROWS = 1024     # 512 KiB per buffer in the gridded (pipelined) path


def composite_forward(x):
    """CompositeModule.forward(x, w=[]) via a fused Pallas TPU kernel."""
    orig_shape = x.shape
    n = x.size

    # Flatten to a lane-dense 2-D slab; pad to a multiple of (8, 128).
    chunk = SUBLANES * LANES
    n_pad = pl.cdiv(n, chunk) * chunk
    flat = x.reshape(-1)
    if n_pad != n:
        flat = jnp.pad(flat, (0, n_pad - n))
    rows = n_pad // LANES
    x2d = flat.reshape(rows, LANES)

    if rows <= _SMALL_ROWS:
        # Tiny input: whole array as one VMEM block, no grid / pipeline.
        out2d = pl.pallas_call(
            scale_kernel,
            out_shape=jax.ShapeDtypeStruct((rows, LANES), x.dtype),
            in_specs=[pl.BlockSpec(memory_space=pltpu.MemorySpace.VMEM)],
            out_specs=pl.BlockSpec(memory_space=pltpu.MemorySpace.VMEM),
        )(x2d)
    else:
        # Large input: 1-D row grid, double-buffered DMA pipeline, block size
        # sized well under every generation's scoped VMEM (incl. v7x 32 MiB).
        grid = (pl.cdiv(rows, _BLOCK_ROWS),)
        out2d = pl.pallas_call(
            scale_kernel,
            out_shape=jax.ShapeDtypeStruct((rows, LANES), x.dtype),
            grid=grid,
            in_specs=[pl.BlockSpec((_BLOCK_ROWS, LANES), lambda i: (i, 0))],
            out_specs=pl.BlockSpec((_BLOCK_ROWS, LANES), lambda i: (i, 0)),
            compiler_params=pltpu.CompilerParams(
                dimension_semantics=("parallel",),
            ),
        )(x2d)

    out = out2d.reshape(-1)
    if n_pad != n:
        out = out[:n]
    return out.reshape(orig_shape)


if __name__ == "__main__":
    # Small path (gridless): NCHW input matching the PyTorch convention.
    key = jax.random.PRNGKey(0)
    x = jax.random.normal(key, (2, 4, 16, 16), dtype=jnp.float32)

    out = jax.block_until_ready(composite_forward(x))
    ref = composite_ref.forward(x, w=[])
    assert out.shape == ref.shape and out.dtype == ref.dtype
    assert jnp.allclose(out, ref, atol=1e-6, rtol=1e-6)

    # Large path (gridded, "parallel" row axis) to validate the pipelined tiling.
    x_big = jax.random.normal(jax.random.PRNGKey(1), (8, 64, 128, 128),
                              dtype=jnp.float32)
    out_big = jax.block_until_ready(composite_forward(x_big))
    ref_big = composite_ref.forward(x_big, w=[])
    assert out_big.shape == ref_big.shape and out_big.dtype == ref_big.dtype
    assert jnp.allclose(out_big, ref_big, atol=1e-5, rtol=1e-6)

    print("KERNEL_OK")
</pallas_src>

<mosaic_0001>
module attributes {stable_mosaic.version = 11 : i64} {
  func.func @scale_kernel(%arg0: memref<16x128xf32, #tpu.memory_space<vmem>>, %arg1: memref<16x128xf32, #tpu.memory_space<vmem>>) attributes {dimension_semantics = [], scalar_prefetch = 0 : i64, scratch_operands = 0 : i64, tpu.core_type = #tpu.core_type<tc>} {
    %c0 = arith.constant 0 : index
    %c0_0 = arith.constant 0 : index
    %0 = vector.load %arg0[%c0, %c0_0] : memref<16x128xf32, #tpu.memory_space<vmem>>, vector<16x128xf32>
    %cst = arith.constant 2.500000e+00 : f32
    %1 = vector.broadcast %cst : f32 to vector<16x128xf32>
    %2 = arith.mulf %0, %1 : vector<16x128xf32>
    %c0_1 = arith.constant 0 : index
    %c0_2 = arith.constant 0 : index
    %3 = vector.load %arg1[%c0_1, %c0_2] : memref<16x128xf32, #tpu.memory_space<vmem>>, vector<16x128xf32>
    tpu.vector_store %arg1[%c0_1, %c0_2], %2 {strides = array<i32>} : memref<16x128xf32, #tpu.memory_space<vmem>>, vector<16x128xf32>,
    return
  }
}

</mosaic_0001>

<llo_original>
// kernel: tpu_custom_call.1
$region0: #{tpu_custom_call.1}
  #allocation0 [shape = 'u32[]', space=smem, size = 0x4, offset = 0x4, fixed_abs, tag = 'smem constant byte address 0x4 - core index']
  #allocation1 [shape = 'u32[144,128]{1,0:T(1,128)}', space=vmem, size = 0x12000, scoped, tag = 'internal scratch']
  %s0 = inlined_call_operand.hbm [shape: f32[16,128], index: 0, kind: input, shape index: {}]
  %s1 = inlined_call_operand.hbm [shape: f32[16,128], index: 1, kind: output, shape index: {}]
  %s2 = sld [smem:[#allocation0]]
  $region18: #{tpu_custom_call.1} parent=0
    _
  %s4 = ssub.s32 1, %s2
  %s5 = scalar_select 0, %s4, %s2
  $region1: #{tpu_custom_call.1} parent=0
    #allocation2 [shape = 'u8[8192]{0}', space=vmem, size = 0x2000, scoped, tag = 'input window, operand 0, single buffered']
    #allocation3 [shape = 's32[1]{0}', space=sflag, size = 0x4, scoped, tag = 'scoped memory for tpu_custom_call.1']
    #allocation4 [shape = 's32[1]{0}', space=sflag, size = 0x4, scoped, tag = 'scoped memory for tpu_custom_call.1']
    #allocation5 [shape = 'u8[8192]{0}', space=vmem, size = 0x2000, scoped, tag = 'output window, operand 0, single buffered']
    %6 = vsyncpa [#allocation3], 0
    %7 = vsyncpa [#allocation4], 0
    // Predicated region
    $region2: #{tpu_custom_call.1} parent=1 // pred_check
      _
    $region3: #{tpu_custom_call.1} parent=1 // pred_check_branch
      %9 = sbr.rel (0) target = $region5
    $region4: #{tpu_custom_call.1} parent=1 // pred_region
      %s11 = ssub.s32 256, 256
      %12 = vsyncadd [#allocation3], %s11
      %s13 = sshll.u32 [#allocation2], 4
      %s14 = int_to_ptr.vmem [resolvable:$true] %s13
      %19 = dma.hbm_to_vmem [thread:$0]  %s0, 256, %s14, [#allocation3], 128, 128, 8
    $region5: #{tpu_custom_call.1} parent=1 // pred_fallthru
      _
    // Predicated region
    $region6: #{tpu_custom_call.1} parent=1 // pred_check
      _
    $region7: #{tpu_custom_call.1} parent=1 // pred_check_branch
      %21 = sbr.rel (0) target = $region9
    $region8: #{tpu_custom_call.1} parent=1 // pred_region
      %22 = dma.done [#allocation3], 256
    $region9: #{tpu_custom_call.1} parent=1 // pred_fallthru
      _
    %v23 = vld [vmem:[#allocation2] sm:$0xff]
    %v24 = vld [vmem:[#allocation2 + $0x8] sm:$0xff]
    %v25 = vmul.f32 %v23, 2.5
    %v26 = vmul.f32 %v24, 2.5
    %27 = vst [vmem:[#allocation5] sm:$0xff] %v25
    %28 = vst [vmem:[#allocation5 + $0x8] sm:$0xff] %v26
    // Predicated region
    $region10: #{tpu_custom_call.1} parent=1 // pred_check
      _
    $region11: #{tpu_custom_call.1} parent=1 // pred_check_branch
      %30 = sbr.rel (0) target = $region13
    $region12: #{tpu_custom_call.1} parent=1 // pred_region
      %s32 = ssub.s32 256, 256
      %33 = vsyncadd [#allocation4], %s32
      %s34 = sshll.u32 [#allocation5], 4
      %s35 = int_to_ptr.vmem [resolvable:$true] %s34
      %40 = dma.vmem_to_hbm [thread:$0]  %s35, 256, %s1, [#allocation4], 128, 128, 8
    $region13: #{tpu_custom_call.1} parent=1 // pred_fallthru
      _
    // Predicated region
    $region14: #{tpu_custom_call.1} parent=1 // pred_check
      _
    $region15: #{tpu_custom_call.1} parent=1 // pred_check_branch
      %42 = sbr.rel (0) target = $region17
    $region16: #{tpu_custom_call.1} parent=1 // pred_region
      %43 = dma.done [#allocation4], 256
    $region17: #{tpu_custom_call.1} parent=1 // pred_fallthru
      _
    %44 = vsyncpa [#allocation3], 1
    %45 = vsyncpa [#allocation4], 1

</llo_original>
